<compile_context>
chip_gen: v7x
topology: tpu7x:2x2x1
jax: 0.10.0
libtpu: 0.0.40
codegen_flags: <defaults>
</compile_context>

<pallas_src>
import functools

import jax
import jax.numpy as jnp
from jax.experimental import pallas as pl
from jax.experimental.pallas import tpu as pltpu


def _res_stack_kernel(x_ref, w_ref, b_ref, o_ref, h_acc):
    """One grid step = one ResLayerFC block applied to the resident activation.

    x_ref: (bm, H)    input batch tile (consumed only at layer 0; resident)
    w_ref: (1, H, H)  bf16 weight of the current layer (x @ W layout)
    b_ref: (1, 1, H)  f32 bias of the current layer
    o_ref: (bm, H)    output tile (written only at the last layer)
    h_acc: (bm, H)    f32 VMEM scratch, resident across the layer axis
    """
    layer = pl.program_id(1)

    @pl.when(layer == 0)
    def _init():
        h_acc[...] = x_ref[...].astype(jnp.float32)

    h = h_acc[...]                                 # one VMEM->vreg load, reused
    y = jnp.dot(h.astype(w_ref.dtype), w_ref[0],
                preferred_element_type=jnp.float32)  # MXU, f32 accumulate
    y = y + b_ref[0]
    h = h + jnp.maximum(y, 0.0)                    # residual + ReLU on f32 (VPU)
    h_acc[...] = h

    @pl.when(layer == pl.num_programs(1) - 1)
    def _finalize():
        o_ref[...] = h.astype(o_ref.dtype)


def res_layer_fc_stack(x, w_stack, b_stack, *, bm=None):
    """Applies L sequential ResLayerFC blocks: h <- h + ReLU(h @ W_l + b_l).

    x:       (B, H)
    w_stack: (L, H, H)   stored as (in, out) so the kernel computes h @ W
    b_stack: (L, H)
    """
    B, H = x.shape
    L = w_stack.shape[0]

    if bm is None:
        bm = B if B <= 256 else 256          # fills the 256-wide v6e/v7x MXU

    # Pad the batch to a multiple of the tile (padded rows are sliced off).
    B_pad = pl.cdiv(B, bm) * bm
    if B_pad != B:
        x_in = jnp.zeros((B_pad, H), dtype=x.dtype).at[:B].set(x)
    else:
        x_in = x

    b_stack = b_stack.reshape(L, 1, H).astype(jnp.float32)
    w_bytes = w_stack.dtype.itemsize
    x_bytes = x_in.dtype.itemsize

    n_batch_tiles = B_pad // bm

    # Working set: double-buffered weight/bias blocks, x/out tiles, scratch.
    vmem_bytes = (2 * H * H * w_bytes            # weight block, double-buffered
                  + 2 * H * 4                    # bias block
                  + 2 * bm * H * x_bytes * 2     # x tile + out tile
                  + bm * H * 4)                  # f32 activation scratch
    vmem_limit = min(int(vmem_bytes * 1.5) + (2 << 20), 100 * 1024 * 1024)

    cost = pl.CostEstimate(
        flops=2 * B_pad * H * H * L + 3 * B_pad * H * L,
        transcendentals=0,
        bytes_accessed=(n_batch_tiles * L * H * H * w_bytes   # weight stream
                        + B_pad * H * x_bytes * 2             # x in, out
                        + n_batch_tiles * L * H * 4),         # biases
    )

    out = pl.pallas_call(
        _res_stack_kernel,
        out_shape=jax.ShapeDtypeStruct((B_pad, H), x.dtype),
        grid_spec=pltpu.PrefetchScalarGridSpec(
            num_scalar_prefetch=0,
            grid=(n_batch_tiles, L),       # (batch tiles, layers); layers last
            in_specs=[
                pl.BlockSpec((bm, H), lambda i, l: (i, 0)),      # x (resident per tile)
                pl.BlockSpec((1, H, H), lambda i, l: (l, 0, 0)),  # layer-l weight
                pl.BlockSpec((1, 1, H), lambda i, l: (l, 0, 0)),  # layer-l bias
            ],
            out_specs=pl.BlockSpec((bm, H), lambda i, l: (i, 0)),
            scratch_shapes=[pltpu.VMEM((bm, H), jnp.float32)],
        ),
        compiler_params=pltpu.CompilerParams(
            dimension_semantics=("parallel", "arbitrary"),
            vmem_limit_bytes=vmem_limit,
        ),
        cost_estimate=cost,
    )(x_in, w_stack, b_stack)

    if B_pad != B:
        out = out[:B]
    return out


def res_layer_fc(x, w, b):
    """Exact ResLayerFC.forward: x + ReLU(x @ w + b)   (w is (H_in, H_out))."""
    return res_layer_fc_stack(x, w[None], b[None])


# ------------------------- parameter construction -------------------------

def init_res_layer_params(key, num_hid, num_layers, w_dtype=jnp.bfloat16):
    """kaiming_normal weights (torch layout, then transposed) + small biases."""
    keys = jax.random.split(key, 2 * num_layers)
    std = (2.0 / num_hid) ** 0.5                      # kaiming_normal, fan_in = H
    ws, bs = [], []
    for l in range(num_layers):
        w_torch = std * jax.random.normal(keys[2 * l], (num_hid, num_hid),
                                          dtype=jnp.float32)
        ws.append(w_torch.T.astype(w_dtype))          # (in, out) so kernel does h @ W
        bs.append(0.01 * jax.random.normal(keys[2 * l + 1], (num_hid,),
                                           dtype=jnp.float32))
    return jnp.stack(ws), jnp.stack(bs)


# ------------------------------- reference --------------------------------

def ref_forward(x, w_stack, b_stack):
    h = x.astype(jnp.float32)
    for l in range(w_stack.shape[0]):
        y = jnp.dot(h.astype(w_stack.dtype), w_stack[l],
                    preferred_element_type=jnp.float32)
        h = h + jnp.maximum(y + b_stack[l], 0.0)
    return h


# TODO(synk): kaiming_init / greg_init / register_hook are init-time and
# autograd-hook utilities with no forward-pass Pallas equivalent.

if __name__ == "__main__":
    num_hid = 128
    num_layers = 4
    batch = 8

    key = jax.random.PRNGKey(0)
    k_params, k_x = jax.random.split(key)

    w_stack, b_stack = init_res_layer_params(k_params, num_hid, num_layers)
    x = jax.random.normal(k_x, (batch, num_hid), dtype=jnp.float32)

    # 1) single ResLayerFC block (matches the PyTorch module exactly)
    out1 = jax.block_until_ready(res_layer_fc(x, w_stack[0], b_stack[0]))
    assert out1.shape == (batch, num_hid), out1.shape
    ref1 = ref_forward(x, w_stack[:1], b_stack[:1])
    assert jnp.allclose(out1, ref1, atol=1e-2, rtol=1e-2)

    # 2) L stacked ResLayerFC blocks fused into one pallas_call
    stacked = jax.jit(functools.partial(res_layer_fc_stack))
    outL = jax.block_until_ready(stacked(x, w_stack, b_stack))
    assert outL.shape == (batch, num_hid), outL.shape
    refL = ref_forward(x, w_stack, b_stack)
    assert jnp.allclose(outL, refL, atol=1e-2, rtol=1e-2)

    # 3) batch not aligned to the tile (exercises the padding path)
    x_odd = jax.random.normal(k_x, (6, num_hid), dtype=jnp.float32)
    out_odd = jax.block_until_ready(res_layer_fc_stack(x_odd, w_stack, b_stack))
    ref_odd = ref_forward(x_odd, w_stack, b_stack)
    assert jnp.allclose(out_odd, ref_odd, atol=1e-2, rtol=1e-2)

    print("KERNEL_OK")
</pallas_src>

<mosaic_0001>
module attributes {stable_mosaic.version = 11 : i64} {
  func.func @_res_stack_kernel(%arg0: i32, %arg1: i32, %arg2: memref<8x128xf32, #tpu.memory_space<vmem>>, %arg3: memref<1x128x128xbf16, #tpu.memory_space<vmem>>, %arg4: memref<1x1x128xf32, #tpu.memory_space<vmem>>, %arg5: memref<8x128xf32, #tpu.memory_space<vmem>>, %arg6: memref<8x128xf32, #tpu.memory_space<vmem>>) attributes {dimension_semantics = [#tpu.dimension_semantics<parallel>, #tpu.dimension_semantics<arbitrary>], iteration_bounds = array<i64: 1, 1>, scalar_prefetch = 0 : i64, scratch_operands = 1 : i64, tpu.core_type = #tpu.core_type<tc>, window_params = [{transform_indices = @transform_0, window_bounds = array<i64: 8, 128>}, {transform_indices = @transform_1, window_bounds = array<i64: 1, 128, 128>}, {transform_indices = @transform_2, window_bounds = array<i64: 1, 1, 128>}, {transform_indices = @transform_3, window_bounds = array<i64: 8, 128>}]} {
    %c0_i32 = arith.constant 0 : i32
    %0 = arith.cmpi eq, %arg1, %c0_i32 : i32
    %1 = arith.extui %0 : i1 to i32
    %c0_i32_0 = arith.constant 0 : i32
    %2 = arith.cmpi ne, %1, %c0_i32_0 : i32
    scf.if %2 {
      %c0_13 = arith.constant 0 : index
      %c0_14 = arith.constant 0 : index
      %19 = vector.load %arg2[%c0_13, %c0_14] : memref<8x128xf32, #tpu.memory_space<vmem>>, vector<8x128xf32>
      %c0_15 = arith.constant 0 : index
      %c0_16 = arith.constant 0 : index
      %20 = vector.load %arg6[%c0_15, %c0_16] : memref<8x128xf32, #tpu.memory_space<vmem>>, vector<8x128xf32>
      tpu.vector_store %arg6[%c0_15, %c0_16], %19 {strides = array<i32>} : memref<8x128xf32, #tpu.memory_space<vmem>>, vector<8x128xf32>,
    } else {
    }
    %c0 = arith.constant 0 : index
    %c0_1 = arith.constant 0 : index
    %3 = vector.load %arg6[%c0, %c0_1] : memref<8x128xf32, #tpu.memory_space<vmem>>, vector<8x128xf32>
    %4 = arith.truncf %3 : vector<8x128xf32> to vector<8x128xbf16>
    %c0_2 = arith.constant 0 : index
    %c0_3 = arith.constant 0 : index
    %c0_4 = arith.constant 0 : index
    %5 = vector.load %arg3[%c0_2, %c0_3, %c0_4] : memref<1x128x128xbf16, #tpu.memory_space<vmem>>, vector<1x128x128xbf16>
    %6 = vector.shape_cast %5 : vector<1x128x128xbf16> to vector<128x128xbf16>
    %cst = arith.constant dense<0.000000e+00> : vector<8x128xf32>
    %7 = tpu.matmul %4, %6, %cst {dimension_numbers = #tpu.dot_dimension_numbers<[1], [0], [0], [1], [0, 0, 1, 1], [], []>} : vector<8x128xbf16>, vector<128x128xbf16>, vector<8x128xf32> -> vector<8x128xf32>
    %c0_5 = arith.constant 0 : index
    %c0_6 = arith.constant 0 : index
    %c0_7 = arith.constant 0 : index
    %8 = vector.load %arg4[%c0_5, %c0_6, %c0_7] : memref<1x1x128xf32, #tpu.memory_space<vmem>>, vector<1x1x128xf32>
    %9 = vector.shape_cast %8 : vector<1x1x128xf32> to vector<1x128xf32>
    %10 = vector.broadcast %9 : vector<1x128xf32> to vector<8x128xf32>
    %11 = arith.addf %7, %10 : vector<8x128xf32>
    %cst_8 = arith.constant 0.000000e+00 : f32
    %12 = vector.broadcast %cst_8 : f32 to vector<8x128xf32>
    %13 = arith.maximumf %11, %12 : vector<8x128xf32>
    %14 = arith.addf %3, %13 : vector<8x128xf32>
    %c0_9 = arith.constant 0 : index
    %c0_10 = arith.constant 0 : index
    %15 = vector.load %arg6[%c0_9, %c0_10] : memref<8x128xf32, #tpu.memory_space<vmem>>, vector<8x128xf32>
    tpu.vector_store %arg6[%c0_9, %c0_10], %14 {strides = array<i32>} : memref<8x128xf32, #tpu.memory_space<vmem>>, vector<8x128xf32>,
    %c0_i32_11 = arith.constant 0 : i32
    %16 = arith.cmpi eq, %arg1, %c0_i32_11 : i32
    %17 = arith.extui %16 : i1 to i32
    %c0_i32_12 = arith.constant 0 : i32
    %18 = arith.cmpi ne, %17, %c0_i32_12 : i32
    scf.if %18 {
      %c0_13 = arith.constant 0 : index
      %c0_14 = arith.constant 0 : index
      %19 = vector.load %arg5[%c0_13, %c0_14] : memref<8x128xf32, #tpu.memory_space<vmem>>, vector<8x128xf32>
      tpu.vector_store %arg5[%c0_13, %c0_14], %14 {strides = array<i32>} : memref<8x128xf32, #tpu.memory_space<vmem>>, vector<8x128xf32>,
    } else {
    }
    return
  }
  func.func @transform_0(%arg0: i32, %arg1: i32) -> (i32, i32) {
    %c0_i32 = arith.constant 0 : i32
    %c0_i32_0 = arith.constant 0 : i32
    return %arg0, %c0_i32 : i32, i32
  }
  func.func @transform_1(%arg0: i32, %arg1: i32) -> (i32, i32, i32) {
    %c0_i32 = arith.constant 0 : i32
    %c0_i32_0 = arith.constant 0 : i32
    %c0_i32_1 = arith.constant 0 : i32
    return %arg1, %c0_i32, %c0_i32_0 : i32, i32, i32
  }
  func.func @transform_2(%arg0: i32, %arg1: i32) -> (i32, i32, i32) {
    %c0_i32 = arith.constant 0 : i32
    %c0_i32_0 = arith.constant 0 : i32
    %c0_i32_1 = arith.constant 0 : i32
    return %arg1, %c0_i32, %c0_i32_0 : i32, i32, i32
  }
  func.func @transform_3(%arg0: i32, %arg1: i32) -> (i32, i32) {
    %c0_i32 = arith.constant 0 : i32
    %c0_i32_0 = arith.constant 0 : i32
    return %arg0, %c0_i32 : i32, i32
  }
}

</mosaic_0001>

<llo_original>
// kernel: tpu_custom_call.1
$region0: #{tpu_custom_call.1}
  #allocation0 [shape = 'u32[]', space=smem, size = 0x4, offset = 0x4, fixed_abs, tag = 'smem constant byte address 0x4 - core index']
  #allocation1 [shape = 'u32[144,128]{1,0:T(1,128)}', space=vmem, size = 0x12000, scoped, tag = 'internal scratch']
  #allocation2 [shape = 'f32[8,128]{1,0:T(8,128)}', space=vmem, size = 0x1000, scoped, tag = 'scratch operand']
  %s0 = inlined_call_operand.hbm [shape: f32[8,128], index: 0, kind: input, shape index: {}]
  %s1 = inlined_call_operand.hbm [shape: bf16[1,128,128], index: 1, kind: input, shape index: {}]
  %s2 = inlined_call_operand.vmem [shape: f32[1,1,128], index: 2, kind: input, shape index: {}]
  %s3 = inlined_call_operand.hbm [shape: f32[8,128], index: 3, kind: output, shape index: {}]
  %s4 = sld [smem:[#allocation0]]
  $region38: #{tpu_custom_call.1} parent=0
    _
  %s6 = ssub.s32 1, %s4
  %s7 = scalar_select 0, %s6, %s4
  $region1: #{tpu_custom_call.1} parent=0
    #allocation3 [shape = 'u8[4096]{0}', space=vmem, size = 0x1000, scoped, tag = 'input window, operand 0, single buffered']
    #allocation4 [shape = 's32[1]{0}', space=sflag, size = 0x4, scoped, tag = 'scoped memory for tpu_custom_call.1']
    #allocation5 [shape = 's32[1]{0}', space=sflag, size = 0x4, scoped, tag = 'scoped memory for tpu_custom_call.1']
    #allocation6 [shape = 'u8[32768]{0}', space=vmem, size = 0x8000, scoped, tag = 'input window, operand 1, single buffered']
    #allocation7 [shape = 's32[1]{0}', space=sflag, size = 0x4, scoped, tag = 'scoped memory for tpu_custom_call.1']
    #allocation8 [shape = 'u8[4096]{0}', space=vmem, size = 0x1000, scoped, tag = 'output window, operand 0, single buffered']
    %8 = vsyncpa [#allocation4], 0
    %9 = vsyncpa [#allocation7], 0
    %10 = vsyncpa [#allocation5], 0
    // Predicated region
    $region2: #{tpu_custom_call.1} parent=1 // pred_check
      _
    $region3: #{tpu_custom_call.1} parent=1 // pred_check_branch
      %12 = sbr.rel (0) target = $region5
    $region4: #{tpu_custom_call.1} parent=1 // pred_region
      %s14 = ssub.s32 128, 128
      %15 = vsyncadd [#allocation4], %s14
      %s17 = sshll.u32 [#allocation3], 4
      %s18 = int_to_ptr.vmem [resolvable:$true] %s17
      %20 = dma.hbm_to_vmem [thread:$0]  %s0, 128, %s18, [#allocation4]
    $region5: #{tpu_custom_call.1} parent=1 // pred_fallthru
      _
    // Predicated region
    $region6: #{tpu_custom_call.1} parent=1 // pred_check
      _
    $region7: #{tpu_custom_call.1} parent=1 // pred_check_branch
      %22 = sbr.rel (0) target = $region9
    $region8: #{tpu_custom_call.1} parent=1 // pred_region
      %s24 = ssub.s32 1024, 1024
      %25 = vsyncadd [#allocation7], %s24
      %s26 = sshll.u32 [#allocation6], 4
      %s27 = int_to_ptr.vmem [resolvable:$true] %s26
      %32 = dma.hbm_to_vmem [thread:$0]  %s1, 1024, %s27, [#allocation7], 64, 64, 4
    $region9: #{tpu_custom_call.1} parent=1 // pred_fallthru
      _
    // Predicated region
    $region10: #{tpu_custom_call.1} parent=1 // pred_check
      _
    $region11: #{tpu_custom_call.1} parent=1 // pred_check_branch
      %34 = sbr.rel (0) target = $region13
    $region12: #{tpu_custom_call.1} parent=1 // pred_region
      _
    $region13: #{tpu_custom_call.1} parent=1 // pred_fallthru
      _
    // Predicated region
    $region14: #{tpu_custom_call.1} parent=1 // pred_check
      _
    $region15: #{tpu_custom_call.1} parent=1 // pred_check_branch
      %36 = sbr.rel (0) target = $region17
    $region16: #{tpu_custom_call.1} parent=1 // pred_region
      %37 = dma.done [#allocation4], 128
    $region17: #{tpu_custom_call.1} parent=1 // pred_fallthru
      _
    // Predicated region
    $region18: #{tpu_custom_call.1} parent=1 // pred_check
      _
    $region19: #{tpu_custom_call.1} parent=1 // pred_check_branch
      %39 = sbr.rel (0) target = $region21
    $region20: #{tpu_custom_call.1} parent=1 // pred_region
      %40 = dma.done [#allocation7], 1024
    $region21: #{tpu_custom_call.1} parent=1 // pred_fallthru
      _
    %p42 = scmp.eq.s32.totalorder 0, 0
    // Predicated region
    $region22: #{tpu_custom_call.1} parent=1 // pred_check
      %p43 = pneg %p42
    $region23: #{tpu_custom_call.1} parent=1 // pred_check_branch
      %45 = sbr.rel (%p43) target = $region25
    $region24: #{tpu_custom_call.1} parent=1 // pred_region
      %v46 = vld [vmem:[#allocation3] sm:$0xff]
      %47 = vst [vmem:[#allocation2] sm:$0xff] %v46
    $region25: #{tpu_custom_call.1} parent=1 // pred_fallthru
      _
    %v48 = vld [vmem:[#allocation2] sm:$0xff]
    %v49 = vpack.c.bf16 %v48, %v48
    %v50 = vld [vmem:[#allocation6] sm:$0xf]
    %v51 = vld [vmem:[#allocation6 + $0x4] sm:$0xf]
    %v52 = vld [vmem:[#allocation6 + $0x8] sm:$0xf]
    %v53 = vld [vmem:[#allocation6 + $0xc] sm:$0xf]
    %v54 = vld [vmem:[#allocation6 + $0x10] sm:$0xf]
    %v55 = vld [vmem:[#allocation6 + $0x14] sm:$0xf]
    %v56 = vld [vmem:[#allocation6 + $0x18] sm:$0xf]
    %v57 = vld [vmem:[#allocation6 + $0x1c] sm:$0xf]
    %v58 = vld [vmem:[#allocation6 + $0x20] sm:$0xf]
    %v59 = vld [vmem:[#allocation6 + $0x24] sm:$0xf]
    %v60 = vld [vmem:[#allocation6 + $0x28] sm:$0xf]
    %v61 = vld [vmem:[#allocation6 + $0x2c] sm:$0xf]
    %v62 = vld [vmem:[#allocation6 + $0x30] sm:$0xf]
    %v63 = vld [vmem:[#allocation6 + $0x34] sm:$0xf]
    %v64 = vld [vmem:[#allocation6 + $0x38] sm:$0xf]
    %v65 = vld [vmem:[#allocation6 + $0x3c] sm:$0xf]
    %v66 = vld [vmem:[%s2] sm:$0x1]
    %v68 = vlaneseq
    %v69 = vshrl.u32 %v68, 7
    %v70 = vsub.s32 0, %v69
    %v71 = vrot.slane %v66, %v70
    %v89 = vunpack.c.l.b16 %v50
    %v90 = vunpack.c.l.b16 %v51
    %v91 = vunpack.c.l.b16 %v52
    %v92 = vunpack.c.l.b16 %v53
    %v93 = vunpack.c.l.b16 %v54
    %v94 = vunpack.c.l.b16 %v55
    %v95 = vunpack.c.l.b16 %v56
    %v96 = vunpack.c.l.b16 %v57
    %v97 = vunpack.c.l.b16 %v58
    %v98 = vunpack.c.l.b16 %v59
    %v99 = vunpack.c.l.b16 %v60
    %v100 = vunpack.c.l.b16 %v61
    %v101 = vunpack.c.l.b16 %v62
    %v102 = vunpack.c.l.b16 %v63
    %v103 = vunpack.c.l.b16 %v64
    %v104 = vunpack.c.l.b16 %v65
    %v105 = vpack.c.b16 %v90, %v89
    %v106 = vpack.c.b16 %v92, %v91
    %v107 = vpack.c.b16 %v94, %v93
    %v108 = vpack.c.b16 %v96, %v95
    %v109 = vpack.c.b16 %v98, %v97
    %v110 = vpack.c.b16 %v100, %v99
    %v111 = vpack.c.b16 %v102, %v101
    %v112 = vpack.c.b16 %v104, %v103
    %121 = vmatprep.subr.bf16.mxu0 0
    %122 = vmatpush1.bf16.msra.mxu0 %v105
    %123 = vmatprep.subr.bf16.mxu0 0
    %124 = vmatpush1.bf16.msra.mxu0 %v106
    %125 = vmatprep.subr.bf16.mxu0 0
    %126 = vmatpush1.bf16.msra.mxu0 %v107
    %127 = vmatprep.subr.bf16.mxu0 0
    %128 = vmatpush1.bf16.msra.mxu0 %v108
    %129 = vmatprep.subr.bf16.mxu0 0
    %130 = vmatpush1.bf16.msra.mxu0 %v109
    %131 = vmatprep.subr.bf16.mxu0 0
    %132 = vmatpush1.bf16.msra.mxu0 %v110
    %133 = vmatprep.subr.bf16.mxu0 0
    %134 = vmatpush1.bf16.msra.mxu0 %v111
    %135 = vmatprep.subr.bf16.mxu0 0
    %136 = vmatpush1.bf16.msra.mxu0 %v112
    %137 = vmatprep.subr.bf16.mxu0 0
    %138 = vmatpush1.bf16.msra.mxu0 0
    %139 = vmatprep.subr.bf16.mxu0 0
    %140 = vmatpush1.bf16.msra.mxu0 0
    %141 = vmatprep.subr.bf16.mxu0 0
    %142 = vmatpush1.bf16.msra.mxu0 0
    %143 = vmatprep.subr.bf16.mxu0 0
    %144 = vmatpush1.bf16.msra.mxu0 0
    %145 = vmatprep.subr.bf16.mxu0 0
    %146 = vmatpush1.bf16.msra.mxu0 0
    %147 = vmatprep.subr.bf16.mxu0 0
    %148 = vmatpush1.bf16.msra.mxu0 0
    %149 = vmatprep.subr.bf16.mxu0 0
    %150 = vmatpush1.bf16.msra.mxu0 0
    %151 = vmatprep.subr.bf16.mxu0 0
    %152 = vmatpush1.bf16.msra.mxu0 0
    %153 = vmatprep.mubr.bf16.mxu0 0
    %154 = vmatmul.mubr.bf16.gmra.mrb[0].mxu0 %v49
    %v155 = vpop.f32.mrb[0].mxu0
    %v156 = vadd.f32 %v71, %v155
    %v157 = vpop.f32.mrb[0].mxu0
    %v158 = vpop.f32.mrb[0].mxu0
    %v159 = vpop.f32.mrb[0].mxu0
    %160 = vdwg.mxu0
    %v161 = vmax.f32 %v156, 0.0
    %v162 = vadd.f32 %v48, %v161
    %163 = vst [vmem:[#allocation2] sm:$0xff] %v162
    // Predicated region
    $region26: #{tpu_custom_call.1} parent=1 // pred_check
      %p164 = pneg %p42
    $region27: #{tpu_custom_call.1} parent=1 // pred_check_branch
      %166 = sbr.rel (%p164) target = $region29
    $region28: #{tpu_custom_call.1} parent=1 // pred_region
      %167 = vst [vmem:[#allocation8] sm:$0xff] %v162
    $region29: #{tpu_custom_call.1} parent=1 // pred_fallthru
      _
    // Predicated region
    $region30: #{tpu_custom_call.1} parent=1 // pred_check
      _
    $region31: #{tpu_custom_call.1} parent=1 // pred_check_branch
      %169 = sbr.rel (0) target = $region33
    $region32: #{tpu_custom_call.1} parent=1 // pred_region
      %s171 = ssub.s32 128, 128
      %172 = vsyncadd [#allocation5], %s171
      %s174 = sshll.u32 [#allocation8], 4
      %s175 = int_to_ptr.vmem [resolvable:$true] %s174
      %177 = dma.vmem_to_hbm [thread:$0]  %s175, 128, %s3, [#allocation5]
    $region33: #{tpu_custom_call.1} parent=1 // pred_fallthru
      _
    // Predicated region
    $region34: #{tpu_custom_call.1} parent=1 // pred_check
      _
    $region35: #{tpu_custom_call.1} parent=1 // pred_check_branch
      %179 = sbr.rel (0) target = $region37
    $region36: #{tpu_custom_call.1} parent=1 // pred_region
      %180 = dma.done [#allocation5], 128
    $region37: #{tpu_custom_call.1} parent=1 // pred_fallthru
      _
    %181 = vsyncpa [#allocation4], 1
    %182 = vsyncpa [#allocation7], 1
    %183 = vsyncpa [#allocation5], 1

</llo_original>
